<compile_context>
chip_gen: v7x
topology: tpu7x:2x2x1
jax: 0.10.0
libtpu: 0.0.40
codegen_flags: <defaults>
</compile_context>

<pallas_src>
import functools
import math

import jax
import jax.numpy as jnp
from jax.experimental import pallas as pl
from jax.experimental.pallas import tpu as pltpu


def _round_up(x, m):
    return ((x + m - 1) // m) * m


def _mix32(x):
    # 32-bit finalizer (murmur3 / splitmix style): bijective, good avalanche.
    x = x ^ (x >> jnp.uint32(16))
    x = x * jnp.uint32(0x7FEB352D)
    x = x ^ (x >> jnp.uint32(15))
    x = x * jnp.uint32(0x846CA68B)
    x = x ^ (x >> jnp.uint32(16))
    return x


def _complex_dropout_kernel(seed_ref, xr_ref, xi_ref, or_ref, oi_ref, *, p, tm, w):
    # scale = dropout's own 1/(1-p) times the module's extra 1/(1-p).
    scale = jnp.float32(1.0 / ((1.0 - p) * (1.0 - p)))
    # Drop iff hash < p * 2^32 (unsigned integer-domain keep test).
    threshold = jnp.uint32(min(int(round(p * 4294967296.0)), 4294967295))

    # Global element index of every lane in this tile (counter for the hash);
    # mixing in program_id keeps the mask distinct per tile / tiling-invariant.
    row0 = (pl.program_id(0) * tm).astype(jnp.uint32)
    rows = jax.lax.broadcasted_iota(jnp.int32, (tm, w), 0).astype(jnp.uint32)
    cols = jax.lax.broadcasted_iota(jnp.int32, (tm, w), 1).astype(jnp.uint32)
    lin = (rows + row0) * jnp.uint32(w) + cols

    seed = seed_ref[0].astype(jnp.uint32)
    h = lin ^ (seed * jnp.uint32(0x9E3779B9))
    h = _mix32(h)
    h = _mix32(h ^ jnp.uint32(0x85EBCA6B))

    keep = h >= threshold
    mask = jnp.where(keep, scale, jnp.float32(0.0))

    or_ref[...] = (xr_ref[...].astype(jnp.float32) * mask).astype(or_ref.dtype)
    oi_ref[...] = (xi_ref[...].astype(jnp.float32) * mask).astype(oi_ref.dtype)


def complex_dropout(xr, xi, seed, *, p=0.5, training=True,
                    lane_width=512, block_rows=256):
    assert xr.shape == xi.shape and xr.dtype == xi.dtype
    assert 0.0 <= p < 1.0, "p must be in [0, 1): the reference divides by (1 - p)"
    orig_shape = xr.shape
    dtype = xr.dtype

    if (not training) or p == 0.0:
        # Eval (or p==0): dropout is identity; module still scales by 1/(1-p).
        # A single scalar multiply -> let XLA fuse it, skip the kernel launch.
        s = jnp.float32(1.0 / (1.0 - p))
        return ((xr.astype(jnp.float32) * s).astype(dtype),
                (xi.astype(jnp.float32) * s).astype(dtype))

    total = int(math.prod(orig_shape))
    w = lane_width                                  # lane-dense, multiple of 128
    rows = -(-total // w)
    tm = min(block_rows, _round_up(rows, 16))       # 16 covers f32 (8) & bf16 (16) sublane mins
    padded_rows = _round_up(rows, tm)
    n_tiles = padded_rows // tm

    flat_r = xr.reshape(-1)
    flat_i = xi.reshape(-1)
    pad = padded_rows * w - total
    if pad:
        flat_r = jnp.pad(flat_r, (0, pad))
        flat_i = jnp.pad(flat_i, (0, pad))
    xr2 = flat_r.reshape(padded_rows, w)
    xi2 = flat_i.reshape(padded_rows, w)
    seed_arr = jnp.asarray([seed], dtype=jnp.int32)

    kernel = functools.partial(_complex_dropout_kernel, p=float(p), tm=tm, w=w)

    out_r, out_i = pl.pallas_call(
        kernel,
        out_shape=(
            jax.ShapeDtypeStruct((padded_rows, w), dtype),
            jax.ShapeDtypeStruct((padded_rows, w), dtype),
        ),
        grid_spec=pltpu.PrefetchScalarGridSpec(
            num_scalar_prefetch=1,                  # seed scalar -> SMEM
            grid=(n_tiles,),
            in_specs=[
                pl.BlockSpec((tm, w), lambda i, seed: (i, 0)),
                pl.BlockSpec((tm, w), lambda i, seed: (i, 0)),
            ],
            out_specs=(
                pl.BlockSpec((tm, w), lambda i, seed: (i, 0)),
                pl.BlockSpec((tm, w), lambda i, seed: (i, 0)),
            ),
        ),
        compiler_params=pltpu.CompilerParams(
            dimension_semantics=("parallel",),
        ),
    )(seed_arr, xr2, xi2)

    out_r = out_r.reshape(-1)[:total].reshape(orig_shape)
    out_i = out_i.reshape(-1)[:total].reshape(orig_shape)
    return out_r, out_i


if __name__ == "__main__":
    key = jax.random.PRNGKey(0)
    kr, ki = jax.random.split(key)
    # Small NCHW shapes consistent with the module's conv-style usage.
    xr = jax.random.normal(kr, (2, 4, 16, 16), dtype=jnp.float32)
    xi = jax.random.normal(ki, (2, 4, 16, 16), dtype=jnp.float32)

    p = 0.5
    out_r, out_i = complex_dropout(xr, xi, seed=1234, p=p, training=True)
    jax.block_until_ready((out_r, out_i))
    assert out_r.shape == xr.shape and out_i.shape == xi.shape

    # Kept elements are x / (1-p)^2, dropped are 0, same mask on real & imag.
    scale = 1.0 / ((1.0 - p) ** 2)
    kept = out_r != 0.0
    vals_ok = bool(jnp.all(jnp.where(kept,
                                     jnp.abs(out_r - xr * scale) < 1e-5,
                                     out_r == 0.0)))
    same_mask = bool(jnp.all((out_r == 0.0) == (out_i == 0.0)))
    keep_frac = float(jnp.mean(kept.astype(jnp.float32)))
    assert vals_ok and same_mask
    assert 0.3 < keep_frac < 0.7  # ~1-p for p=0.5

    # Eval mode: identity * 1/(1-p), no kernel launch.
    er, ei = complex_dropout(xr, xi, seed=0, p=p, training=False)
    jax.block_until_ready((er, ei))
    assert bool(jnp.all(jnp.abs(er - xr * (1.0 / (1.0 - p))) < 1e-5))
    assert bool(jnp.all(jnp.abs(ei - xi * (1.0 / (1.0 - p))) < 1e-5))

    print("KERNEL_OK")
</pallas_src>

<mosaic_0001>
module attributes {stable_mosaic.version = 11 : i64} {
  func.func @_complex_dropout_kernel(%arg0: i32, %arg1: memref<1xi32, #tpu.memory_space<smem>>, %arg2: memref<16x512xf32, #tpu.memory_space<vmem>>, %arg3: memref<16x512xf32, #tpu.memory_space<vmem>>, %arg4: memref<16x512xf32, #tpu.memory_space<vmem>>, %arg5: memref<16x512xf32, #tpu.memory_space<vmem>>) attributes {dimension_semantics = [#tpu.dimension_semantics<parallel>], iteration_bounds = array<i64: 1>, scalar_prefetch = 1 : i64, scratch_operands = 0 : i64, tpu.core_type = #tpu.core_type<tc>, window_params = [{transform_indices = @transform_0, window_bounds = array<i64: 16, 512>}, {transform_indices = @transform_1, window_bounds = array<i64: 16, 512>}, {transform_indices = @transform_2, window_bounds = array<i64: 16, 512>}, {transform_indices = @transform_3, window_bounds = array<i64: 16, 512>}]} {
    %c16_i32 = arith.constant 16 : i32
    %0 = arith.muli %arg0, %c16_i32 : i32
    %1 = tpu.iota {dimensions = array<i32: 0>} : vector<16x512xi32>
    %2 = tpu.iota {dimensions = array<i32: 1>} : vector<16x512xi32>
    %3 = vector.broadcast %0 : i32 to vector<16x512xi32>
    %4 = arith.addi %1, %3 : vector<16x512xi32>
    %c512_i32 = arith.constant 512 : i32
    %5 = vector.broadcast %c512_i32 : i32 to vector<16x512xi32>
    %6 = arith.muli %4, %5 : vector<16x512xi32>
    %7 = arith.addi %6, %2 : vector<16x512xi32>
    %c0 = arith.constant 0 : index
    %8 = memref.load %arg1[%c0] : memref<1xi32, #tpu.memory_space<smem>>
    %c-1640531527_i32 = arith.constant -1640531527 : i32
    %9 = arith.muli %8, %c-1640531527_i32 : i32
    %10 = vector.broadcast %9 : i32 to vector<16x512xi32>
    %11 = arith.xori %7, %10 : vector<16x512xi32>
    %c16_i32_0 = arith.constant 16 : i32
    %12 = vector.broadcast %c16_i32_0 : i32 to vector<16x512xi32>
    %13 = arith.shrui %11, %12 : vector<16x512xi32>
    %14 = arith.xori %11, %13 : vector<16x512xi32>
    %c2146121005_i32 = arith.constant 2146121005 : i32
    %15 = vector.broadcast %c2146121005_i32 : i32 to vector<16x512xi32>
    %16 = arith.muli %14, %15 : vector<16x512xi32>
    %c15_i32 = arith.constant 15 : i32
    %17 = vector.broadcast %c15_i32 : i32 to vector<16x512xi32>
    %18 = arith.shrui %16, %17 : vector<16x512xi32>
    %19 = arith.xori %16, %18 : vector<16x512xi32>
    %c-2073254261_i32 = arith.constant -2073254261 : i32
    %20 = vector.broadcast %c-2073254261_i32 : i32 to vector<16x512xi32>
    %21 = arith.muli %19, %20 : vector<16x512xi32>
    %c16_i32_1 = arith.constant 16 : i32
    %22 = vector.broadcast %c16_i32_1 : i32 to vector<16x512xi32>
    %23 = arith.shrui %21, %22 : vector<16x512xi32>
    %24 = arith.xori %21, %23 : vector<16x512xi32>
    %c-2048144789_i32 = arith.constant -2048144789 : i32
    %25 = vector.broadcast %c-2048144789_i32 : i32 to vector<16x512xi32>
    %26 = arith.xori %24, %25 : vector<16x512xi32>
    %c16_i32_2 = arith.constant 16 : i32
    %27 = vector.broadcast %c16_i32_2 : i32 to vector<16x512xi32>
    %28 = arith.shrui %26, %27 : vector<16x512xi32>
    %29 = arith.xori %26, %28 : vector<16x512xi32>
    %c2146121005_i32_3 = arith.constant 2146121005 : i32
    %30 = vector.broadcast %c2146121005_i32_3 : i32 to vector<16x512xi32>
    %31 = arith.muli %29, %30 : vector<16x512xi32>
    %c15_i32_4 = arith.constant 15 : i32
    %32 = vector.broadcast %c15_i32_4 : i32 to vector<16x512xi32>
    %33 = arith.shrui %31, %32 : vector<16x512xi32>
    %34 = arith.xori %31, %33 : vector<16x512xi32>
    %c-2073254261_i32_5 = arith.constant -2073254261 : i32
    %35 = vector.broadcast %c-2073254261_i32_5 : i32 to vector<16x512xi32>
    %36 = arith.muli %34, %35 : vector<16x512xi32>
    %c16_i32_6 = arith.constant 16 : i32
    %37 = vector.broadcast %c16_i32_6 : i32 to vector<16x512xi32>
    %38 = arith.shrui %36, %37 : vector<16x512xi32>
    %39 = arith.xori %36, %38 : vector<16x512xi32>
    %c-2147483648_i32 = arith.constant -2147483648 : i32
    %40 = vector.broadcast %c-2147483648_i32 : i32 to vector<16x512xi32>
    %41 = arith.cmpi uge, %39, %40 : vector<16x512xi32>
    %cst = arith.constant 4.000000e+00 : f32
    %cst_7 = arith.constant 0.000000e+00 : f32
    %42 = vector.broadcast %cst : f32 to vector<16x512xf32>
    %43 = vector.broadcast %cst_7 : f32 to vector<16x512xf32>
    %44 = arith.select %41, %42, %43 : vector<16x512xi1>, vector<16x512xf32>
    %c0_8 = arith.constant 0 : index
    %c0_9 = arith.constant 0 : index
    %45 = vector.load %arg2[%c0_8, %c0_9] : memref<16x512xf32, #tpu.memory_space<vmem>>, vector<16x512xf32>
    %46 = arith.mulf %45, %44 : vector<16x512xf32>
    %c0_10 = arith.constant 0 : index
    %c0_11 = arith.constant 0 : index
    %47 = vector.load %arg4[%c0_10, %c0_11] : memref<16x512xf32, #tpu.memory_space<vmem>>, vector<16x512xf32>
    tpu.vector_store %arg4[%c0_10, %c0_11], %46 {strides = array<i32>} : memref<16x512xf32, #tpu.memory_space<vmem>>, vector<16x512xf32>,
    %c0_12 = arith.constant 0 : index
    %c0_13 = arith.constant 0 : index
    %48 = vector.load %arg3[%c0_12, %c0_13] : memref<16x512xf32, #tpu.memory_space<vmem>>, vector<16x512xf32>
    %49 = arith.mulf %48, %44 : vector<16x512xf32>
    %c0_14 = arith.constant 0 : index
    %c0_15 = arith.constant 0 : index
    %50 = vector.load %arg5[%c0_14, %c0_15] : memref<16x512xf32, #tpu.memory_space<vmem>>, vector<16x512xf32>
    tpu.vector_store %arg5[%c0_14, %c0_15], %49 {strides = array<i32>} : memref<16x512xf32, #tpu.memory_space<vmem>>, vector<16x512xf32>,
    return
  }
  func.func @transform_0(%arg0: i32, %arg1: memref<1xi32, #tpu.memory_space<smem>>) -> (i32, i32) {
    %c0_i32 = arith.constant 0 : i32
    %c0_i32_0 = arith.constant 0 : i32
    return %arg0, %c0_i32 : i32, i32
  }
  func.func @transform_1(%arg0: i32, %arg1: memref<1xi32, #tpu.memory_space<smem>>) -> (i32, i32) {
    %c0_i32 = arith.constant 0 : i32
    %c0_i32_0 = arith.constant 0 : i32
    return %arg0, %c0_i32 : i32, i32
  }
  func.func @transform_2(%arg0: i32, %arg1: memref<1xi32, #tpu.memory_space<smem>>) -> (i32, i32) {
    %c0_i32 = arith.constant 0 : i32
    %c0_i32_0 = arith.constant 0 : i32
    return %arg0, %c0_i32 : i32, i32
  }
  func.func @transform_3(%arg0: i32, %arg1: memref<1xi32, #tpu.memory_space<smem>>) -> (i32, i32) {
    %c0_i32 = arith.constant 0 : i32
    %c0_i32_0 = arith.constant 0 : i32
    return %arg0, %c0_i32 : i32, i32
  }
}

</mosaic_0001>

<llo_original>
// kernel: tpu_custom_call.1
$region0: #{tpu_custom_call.1}
  #allocation0 [shape = 'u32[]', space=smem, size = 0x4, offset = 0x4, fixed_abs, tag = 'smem constant byte address 0x4 - core index']
  #allocation1 [shape = 'u32[144,128]{1,0:T(1,128)}', space=vmem, size = 0x12000, scoped, tag = 'internal scratch']
  #allocation2 [shape = 's32[1]{0}', space=sflag, size = 0x4, scoped, tag = 'scoped memory for tpu_custom_call.1']
  #allocation3 [shape = 's32[1]{0:T(128)S(6)}', space=smem, size = 0x200, scoped, tag = 'prefetched SMEM operand 0']
  %s0 = inlined_call_operand.<no memory space> [shape: s32[1], index: 0, kind: input, shape index: {}]
  %s1 = inlined_call_operand.hbm [shape: f32[16,512], index: 1, kind: input, shape index: {}]
  %s2 = inlined_call_operand.hbm [shape: f32[16,512], index: 2, kind: input, shape index: {}]
  %s3 = inlined_call_operand.hbm [shape: f32[16,512], index: 3, kind: output, shape index: {0}]
  %s4 = inlined_call_operand.hbm [shape: f32[16,512], index: 4, kind: output, shape index: {1}]
  %5 = xla_tuple %s3, %s4
  %s6 = sld [smem:[#allocation0]]
  $region34: #{tpu_custom_call.1} parent=0
    _
  %s8 = ssub.s32 1, %s6
  %s9 = scalar_select 0, %s8, %s6
  %10 = sst [smem:[#allocation3]] %s0
  $region1: #{tpu_custom_call.1} parent=0
    #allocation4 [shape = 'u8[32768]{0}', space=vmem, size = 0x8000, scoped, tag = 'input window, operand 1, single buffered']
    #allocation5 [shape = 's32[1]{0}', space=sflag, size = 0x4, scoped, tag = 'scoped memory for tpu_custom_call.1']
    #allocation6 [shape = 's32[1]{0}', space=sflag, size = 0x4, scoped, tag = 'scoped memory for tpu_custom_call.1']
    #allocation7 [shape = 'u8[32768]{0}', space=vmem, size = 0x8000, scoped, tag = 'input window, operand 2, single buffered']
    #allocation8 [shape = 's32[1]{0}', space=sflag, size = 0x4, scoped, tag = 'scoped memory for tpu_custom_call.1']
    #allocation9 [shape = 'u8[32768]{0}', space=vmem, size = 0x8000, scoped, tag = 'output window, operand 0, single buffered']
    #allocation10 [shape = 'u8[32768]{0}', space=vmem, size = 0x8000, scoped, tag = 'output window, operand 1, single buffered']
    #allocation11 [shape = 's32[1]{0}', space=sflag, size = 0x4, scoped, tag = 'scoped memory for tpu_custom_call.1']
    %11 = vsyncpa [#allocation5], 0
    %12 = vsyncpa [#allocation8], 0
    %13 = vsyncpa [#allocation6], 0
    %14 = vsyncpa [#allocation11], 0
    // Predicated region
    $region2: #{tpu_custom_call.1} parent=1 // pred_check
      _
    $region3: #{tpu_custom_call.1} parent=1 // pred_check_branch
      %16 = sbr.rel (0) target = $region5
    $region4: #{tpu_custom_call.1} parent=1 // pred_region
      %s18 = ssub.s32 1024, 1024
      %19 = vsyncadd [#allocation5], %s18
      %s20 = sshll.u32 [#allocation4], 4
      %s21 = int_to_ptr.vmem [resolvable:$true] %s20
      %26 = dma.hbm_to_vmem [thread:$0]  %s1, 1024, %s21, [#allocation5], 512, 512, 32
    $region5: #{tpu_custom_call.1} parent=1 // pred_fallthru
      _
    // Predicated region
    $region6: #{tpu_custom_call.1} parent=1 // pred_check
      _
    $region7: #{tpu_custom_call.1} parent=1 // pred_check_branch
      %28 = sbr.rel (0) target = $region9
    $region8: #{tpu_custom_call.1} parent=1 // pred_region
      %s30 = ssub.s32 1024, 1024
      %31 = vsyncadd [#allocation8], %s30
      %s32 = sshll.u32 [#allocation7], 4
      %s33 = int_to_ptr.vmem [resolvable:$true] %s32
      %38 = dma.hbm_to_vmem [thread:$0]  %s2, 1024, %s33, [#allocation8], 512, 512, 32
    $region9: #{tpu_custom_call.1} parent=1 // pred_fallthru
      _
    // Predicated region
    $region10: #{tpu_custom_call.1} parent=1 // pred_check
      _
    $region11: #{tpu_custom_call.1} parent=1 // pred_check_branch
      %40 = sbr.rel (0) target = $region13
    $region12: #{tpu_custom_call.1} parent=1 // pred_region
      %41 = dma.done [#allocation5], 1024
    $region13: #{tpu_custom_call.1} parent=1 // pred_fallthru
      _
    // Predicated region
    $region14: #{tpu_custom_call.1} parent=1 // pred_check
      _
    $region15: #{tpu_custom_call.1} parent=1 // pred_check_branch
      %43 = sbr.rel (0) target = $region17
    $region16: #{tpu_custom_call.1} parent=1 // pred_region
      %44 = dma.done [#allocation8], 1024
    $region17: #{tpu_custom_call.1} parent=1 // pred_fallthru
      _
    %s45 = smul.u32 0, 16
    %v46 = vlaneseq
    %v47 = vshrl.u32 %v46, 7
    %v48 = vadd.s32 %v47, 8
    %v49 = vlaneseq
    %v50 = vand.u32 %v49, 127
    %v51 = vadd.s32 %v50, 128
    %v52 = vadd.s32 %v50, 256
    %v53 = vadd.s32 %v50, 384
    %v54 = vstv %s45
    %v55 = vadd.s32 %v47, %v54
    %v56 = vadd.s32 %v48, %v54
    %v57 = vmul.u32 %v55, 512
    %v58 = vmul.u32 %v56, 512
    %v59 = vadd.s32 %v57, %v50
    %v60 = vadd.s32 %v57, %v51
    %v61 = vadd.s32 %v57, %v52
    %v62 = vadd.s32 %v57, %v53
    %v63 = vadd.s32 %v58, %v50
    %v64 = vadd.s32 %v58, %v51
    %v65 = vadd.s32 %v58, %v52
    %v66 = vadd.s32 %v58, %v53
    %s67 = sld [smem:[#allocation3]]
    %s68 = smul.u32 %s67, 2654435769
    %v69 = vstv %s68
    %v70 = vxor.u32 %v59, %v69
    %v71 = vxor.u32 %v60, %v69
    %v72 = vxor.u32 %v61, %v69
    %v73 = vxor.u32 %v62, %v69
    %v74 = vxor.u32 %v63, %v69
    %v75 = vxor.u32 %v64, %v69
    %v76 = vxor.u32 %v65, %v69
    %v77 = vxor.u32 %v66, %v69
    %v78 = vshrl.u32 %v70, 16
    %v79 = vshrl.u32 %v71, 16
    %v80 = vshrl.u32 %v72, 16
    %v81 = vshrl.u32 %v73, 16
    %v82 = vshrl.u32 %v74, 16
    %v83 = vshrl.u32 %v75, 16
    %v84 = vshrl.u32 %v76, 16
    %v85 = vshrl.u32 %v77, 16
    %v86 = vxor.u32 %v70, %v78
    %v87 = vxor.u32 %v71, %v79
    %v88 = vxor.u32 %v72, %v80
    %v89 = vxor.u32 %v73, %v81
    %v90 = vxor.u32 %v74, %v82
    %v91 = vxor.u32 %v75, %v83
    %v92 = vxor.u32 %v76, %v84
    %v93 = vxor.u32 %v77, %v85
    %v94 = vmul.u32 %v86, 2146121005
    %v95 = vmul.u32 %v87, 2146121005
    %v96 = vmul.u32 %v88, 2146121005
    %v97 = vmul.u32 %v89, 2146121005
    %v98 = vmul.u32 %v90, 2146121005
    %v99 = vmul.u32 %v91, 2146121005
    %v100 = vmul.u32 %v92, 2146121005
    %v101 = vmul.u32 %v93, 2146121005
    %v102 = vshrl.u32 %v94, 15
    %v103 = vshrl.u32 %v95, 15
    %v104 = vshrl.u32 %v96, 15
    %v105 = vshrl.u32 %v97, 15
    %v106 = vshrl.u32 %v98, 15
    %v107 = vshrl.u32 %v99, 15
    %v108 = vshrl.u32 %v100, 15
    %v109 = vshrl.u32 %v101, 15
    %v110 = vxor.u32 %v94, %v102
    %v111 = vxor.u32 %v95, %v103
    %v112 = vxor.u32 %v96, %v104
    %v113 = vxor.u32 %v97, %v105
    %v114 = vxor.u32 %v98, %v106
    %v115 = vxor.u32 %v99, %v107
    %v116 = vxor.u32 %v100, %v108
    %v117 = vxor.u32 %v101, %v109
    %v118 = vmul.u32 %v110, 2221713035
    %v119 = vmul.u32 %v111, 2221713035
    %v120 = vmul.u32 %v112, 2221713035
    %v121 = vmul.u32 %v113, 2221713035
    %v122 = vmul.u32 %v114, 2221713035
    %v123 = vmul.u32 %v115, 2221713035
    %v124 = vmul.u32 %v116, 2221713035
    %v125 = vmul.u32 %v117, 2221713035
    %v126 = vshrl.u32 %v118, 16
    %v127 = vshrl.u32 %v119, 16
    %v128 = vshrl.u32 %v120, 16
    %v129 = vshrl.u32 %v121, 16
    %v130 = vshrl.u32 %v122, 16
    %v131 = vshrl.u32 %v123, 16
    %v132 = vshrl.u32 %v124, 16
    %v133 = vshrl.u32 %v125, 16
    %v134 = vxor.u32 %v118, %v126
    %v135 = vxor.u32 %v119, %v127
    %v136 = vxor.u32 %v120, %v128
    %v137 = vxor.u32 %v121, %v129
    %v138 = vxor.u32 %v122, %v130
    %v139 = vxor.u32 %v123, %v131
    %v140 = vxor.u32 %v124, %v132
    %v141 = vxor.u32 %v125, %v133
    %v142 = vxor.u32 %v134, 2246822507
    %v143 = vxor.u32 %v135, 2246822507
    %v144 = vxor.u32 %v136, 2246822507
    %v145 = vxor.u32 %v137, 2246822507
    %v146 = vxor.u32 %v138, 2246822507
    %v147 = vxor.u32 %v139, 2246822507
    %v148 = vxor.u32 %v140, 2246822507
    %v149 = vxor.u32 %v141, 2246822507
    %v150 = vshrl.u32 %v142, 16
    %v151 = vshrl.u32 %v143, 16
    %v152 = vshrl.u32 %v144, 16
    %v153 = vshrl.u32 %v145, 16
    %v154 = vshrl.u32 %v146, 16
    %v155 = vshrl.u32 %v147, 16
    %v156 = vshrl.u32 %v148, 16
    %v157 = vshrl.u32 %v149, 16
    %v158 = vxor.u32 %v142, %v150
    %v159 = vxor.u32 %v143, %v151
    %v160 = vxor.u32 %v144, %v152
    %v161 = vxor.u32 %v145, %v153
    %v162 = vxor.u32 %v146, %v154
    %v163 = vxor.u32 %v147, %v155
    %v164 = vxor.u32 %v148, %v156
    %v165 = vxor.u32 %v149, %v157
    %v166 = vmul.u32 %v158, 2146121005
    %v167 = vmul.u32 %v159, 2146121005
    %v168 = vmul.u32 %v160, 2146121005
    %v169 = vmul.u32 %v161, 2146121005
    %v170 = vmul.u32 %v162, 2146121005
    %v171 = vmul.u32 %v163, 2146121005
    %v172 = vmul.u32 %v164, 2146121005
    %v173 = vmul.u32 %v165, 2146121005
    %v174 = vshrl.u32 %v166, 15
    %v175 = vshrl.u32 %v167, 15
    %v176 = vshrl.u32 %v168, 15
    %v177 = vshrl.u32 %v169, 15
    %v178 = vshrl.u32 %v170, 15
    %v179 = vshrl.u32 %v171, 15
    %v180 = vshrl.u32 %v172, 15
    %v181 = vshrl.u32 %v173, 15
    %v182 = vxor.u32 %v166, %v174
    %v183 = vxor.u32 %v167, %v175
    %v184 = vxor.u32 %v168, %v176
    %v185 = vxor.u32 %v169, %v177
    %v186 = vxor.u32 %v170, %v178
    %v187 = vxor.u32 %v171, %v179
    %v188 = vxor.u32 %v172, %v180
    %v189 = vxor.u32 %v173, %v181
    %v190 = vmul.u32 %v182, 2221713035
    %v191 = vmul.u32 %v183, 2221713035
    %v192 = vmul.u32 %v184, 2221713035
    %v193 = vmul.u32 %v185, 2221713035
    %v194 = vmul.u32 %v186, 2221713035
    %v195 = vmul.u32 %v187, 2221713035
    %v196 = vmul.u32 %v188, 2221713035
    %v197 = vmul.u32 %v189, 2221713035
    %v198 = vshrl.u32 %v190, 16
    %v199 = vshrl.u32 %v191, 16
    %v200 = vshrl.u32 %v192, 16
    %v201 = vshrl.u32 %v193, 16
    %v202 = vshrl.u32 %v194, 16
    %v203 = vshrl.u32 %v195, 16
    %v204 = vshrl.u32 %v196, 16
    %v205 = vshrl.u32 %v197, 16
    %v206 = vxor.u32 %v190, %v198
    %v207 = vxor.u32 %v191, %v199
    %v208 = vxor.u32 %v192, %v200
    %v209 = vxor.u32 %v193, %v201
    %v210 = vxor.u32 %v194, %v202
    %v211 = vxor.u32 %v195, %v203
    %v212 = vxor.u32 %v196, %v204
    %v213 = vxor.u32 %v197, %v205
    %vm214 = vcmp.ge.u32.totalorder %v206, 2147483648
    %vm215 = vcmp.ge.u32.totalorder %v207, 2147483648
    %vm216 = vcmp.ge.u32.totalorder %v208, 2147483648
    %vm217 = vcmp.ge.u32.totalorder %v209, 2147483648
    %vm218 = vcmp.ge.u32.totalorder %v210, 2147483648
    %vm219 = vcmp.ge.u32.totalorder %v211, 2147483648
    %vm220 = vcmp.ge.u32.totalorder %v212, 2147483648
    %vm221 = vcmp.ge.u32.totalorder %v213, 2147483648
    %v222 = vsel %vm214, 4.0, 0.0
    %v223 = vsel %vm215, 4.0, 0.0
    %v224 = vsel %vm216, 4.0, 0.0
    %v225 = vsel %vm217, 4.0, 0.0
    %v226 = vsel %vm218, 4.0, 0.0
    %v227 = vsel %vm219, 4.0, 0.0
    %v228 = vsel %vm220, 4.0, 0.0
    %v229 = vsel %vm221, 4.0, 0.0
    %v230 = vld [vmem:[#allocation4] sm:$0xff]
    %v231 = vld [vmem:[#allocation4 + $0x8] sm:$0xff]
    %v232 = vld [vmem:[#allocation4 + $0x10] sm:$0xff]
    %v233 = vld [vmem:[#allocation4 + $0x18] sm:$0xff]
    %v234 = vld [vmem:[#allocation4 + $0x20] sm:$0xff]
    %v235 = vld [vmem:[#allocation4 + $0x28] sm:$0xff]
    %v236 = vld [vmem:[#allocation4 + $0x30] sm:$0xff]
    %v237 = vld [vmem:[#allocation4 + $0x38] sm:$0xff]
    %v238 = vmul.f32 %v230, %v222
    %v239 = vmul.f32 %v231, %v223
    %v240 = vmul.f32 %v232, %v224
    %v241 = vmul.f32 %v233, %v225
    %v242 = vmul.f32 %v234, %v226
    %v243 = vmul.f32 %v235, %v227
    %v244 = vmul.f32 %v236, %v228
    %v245 = vmul.f32 %v237, %v229
    %246 = vst [vmem:[#allocation9] sm:$0xff] %v238
    %247 = vst [vmem:[#allocation9 + $0x8] sm:$0xff] %v239
    %248 = vst [vmem:[#allocation9 + $0x10] sm:$0xff] %v240
    %249 = vst [vmem:[#allocation9 + $0x18] sm:$0xff] %v241
    %250 = vst [vmem:[#allocation9 + $0x20] sm:$0xff] %v242
    %251 = vst [vmem:[#allocation9 + $0x28] sm:$0xff] %v243
    %252 = vst [vmem:[#allocation9 + $0x30] sm:$0xff] %v244
    %253 = vst [vmem:[#allocation9 + $0x38] sm:$0xff] %v245
    %v254 = vld [vmem:[#allocation7] sm:$0xff]
    %v255 = vld [vmem:[#allocation7 + $0x8] sm:$0xff]
    %v256 = vld [vmem:[#allocation7 + $0x10] sm:$0xff]
    %v257 = vld [vmem:[#allocation7 + $0x18] sm:$0xff]
    %v258 = vld [vmem:[#allocation7 + $0x20] sm:$0xff]
    %v259 = vld [vmem:[#allocation7 + $0x28] sm:$0xff]
    %v260 = vld [vmem:[#allocation7 + $0x30] sm:$0xff]
    %v261 = vld [vmem:[#allocation7 + $0x38] sm:$0xff]
    %v262 = vmul.f32 %v254, %v222
    %v263 = vmul.f32 %v255, %v223
    %v264 = vmul.f32 %v256, %v224
    %v265 = vmul.f32 %v257, %v225
    %v266 = vmul.f32 %v258, %v226
    %v267 = vmul.f32 %v259, %v227
    %v268 = vmul.f32 %v260, %v228
    %v269 = vmul.f32 %v261, %v229
    %270 = vst [vmem:[#allocation10] sm:$0xff] %v262
    %271 = vst [vmem:[#allocation10 + $0x8] sm:$0xff] %v263
    %272 = vst [vmem:[#allocation10 + $0x10] sm:$0xff] %v264
    %273 = vst [vmem:[#allocation10 + $0x18] sm:$0xff] %v265
    %274 = vst [vmem:[#allocation10 + $0x20] sm:$0xff] %v266
    %275 = vst [vmem:[#allocation10 + $0x28] sm:$0xff] %v267
    %276 = vst [vmem:[#allocation10 + $0x30] sm:$0xff] %v268
    %277 = vst [vmem:[#allocation10 + $0x38] sm:$0xff] %v269
    // Predicated region
    $region18: #{tpu_custom_call.1} parent=1 // pred_check
      _
    $region19: #{tpu_custom_call.1} parent=1 // pred_check_branch
      %279 = sbr.rel (0) target = $region21
    $region20: #{tpu_custom_call.1} parent=1 // pred_region
      %s281 = ssub.s32 1024, 1024
      %282 = vsyncadd [#allocation6], %s281
      %s283 = sshll.u32 [#allocation9], 4
      %s284 = int_to_ptr.vmem [resolvable:$true] %s283
      %289 = dma.vmem_to_hbm [thread:$0]  %s284, 1024, %s3, [#allocation6], 512, 512, 32
    $region21: #{tpu_custom_call.1} parent=1 // pred_fallthru
      _
    // Predicated region
    $region22: #{tpu_custom_call.1} parent=1 // pred_check
      _
    $region23: #{tpu_custom_call.1} parent=1 // pred_check_branch
      %291 = sbr.rel (0) target = $region25
    $region24: #{tpu_custom_call.1} parent=1 // pred_region
      %s293 = ssub.s32 1024, 1024
      %294 = vsyncadd [#allocation11], %s293
      %s295 = sshll.u32 [#allocation10], 4
      %s296 = int_to_ptr.vmem [resolvable:$true] %s295
      %301 = dma.vmem_to_hbm [thread:$0]  %s296, 1024, %s4, [#allocation11], 512, 512, 32
    $region25: #{tpu_custom_call.1} parent=1 // pred_fallthru
      _
    // Predicated region
    $region26: #{tpu_custom_call.1} parent=1 // pred_check
      _
    $region27: #{tpu_custom_call.1} parent=1 // pred_check_branch
      %303 = sbr.rel (0) target = $region29
    $region28: #{tpu_custom_call.1} parent=1 // pred_region
      %304 = dma.done [#allocation6], 1024
    $region29: #{tpu_custom_call.1} parent=1 // pred_fallthru
      _
    // Predicated region
    $region30: #{tpu_custom_call.1} parent=1 // pred_check
      _
    $region31: #{tpu_custom_call.1} parent=1 // pred_check_branch
      %306 = sbr.rel (0) target = $region33
    $region32: #{tpu_custom_call.1} parent=1 // pred_region
      %307 = dma.done [#allocation11], 1024
    $region33: #{tpu_custom_call.1} parent=1 // pred_fallthru
      _
    %308 = vsyncpa [#allocation5], 1
    %309 = vsyncpa [#allocation8], 1
    %310 = vsyncpa [#allocation6], 1
    %311 = vsyncpa [#allocation11], 1

</llo_original>
